<compile_context>
chip_gen: v7x
topology: tpu7x:2x2x1
jax: 0.10.0
libtpu: 0.0.40
codegen_flags: <defaults>
</compile_context>

<pallas_src>
import jax
import jax.numpy as jnp
from jax.experimental import pallas as pl
from jax.experimental.pallas import tpu as pltpu


# ----------------------------------------------------------------------------
# Fused kernel: 1x1 conv (channel matmul) + folded BN affine + ReLU, NCHW layout
# ----------------------------------------------------------------------------
def _conv1x1_bn_relu_kernel(x_ref, w_ref, shift_ref, o_ref):
    # x_ref:    (Cin, ts)   spatial tile, channels on sublanes, spatial on lanes
    # w_ref:    (Cout, Cin) conv weight with BN scale pre-folded (f32)
    # shift_ref:(Cout, 1)   folded conv-bias + BN shift (f32)
    # o_ref:    (Cout, ts)
    y = jnp.dot(w_ref[...], x_ref[...], preferred_element_type=jnp.float32)
    y = y + shift_ref[...]                      # broadcast over lanes
    o_ref[...] = jnp.maximum(y, 0.0).astype(o_ref.dtype)


def conv1x1_bn_relu_nchw(x, w_fold, shift, *, ts=32768, out_dtype=None):
    """x: (N, Cin, HW); w_fold: (Cout, Cin) f32; shift: (Cout,) f32."""
    N, Cin, HW = x.shape
    Cout = w_fold.shape[0]
    out_dtype = out_dtype if out_dtype is not None else x.dtype

    # Cap the spatial tile so the double-buffered in+out footprint stays well
    # under the 32 MiB scoped-VMEM default (also fine on v7x's 64 MiB physical).
    vmem_budget = 16 * 1024 * 1024
    max_ts = max(128, vmem_budget // (2 * 4 * (Cin + Cout)))
    ts = min(ts, max_ts)

    if HW <= ts or ts < 128:
        ts = HW                         # full spatial extent (always legal)
    else:
        ts = (ts // 128) * 128          # lane-dense tile; ragged edge handled by cdiv

    grid = (N, pl.cdiv(HW, ts))

    return pl.pallas_call(
        _conv1x1_bn_relu_kernel,
        out_shape=jax.ShapeDtypeStruct((N, Cout, HW), out_dtype),
        grid_spec=pltpu.PrefetchScalarGridSpec(
            num_scalar_prefetch=0,
            grid=grid,
            in_specs=[
                pl.BlockSpec((pl.Squeezed(), Cin, ts), lambda n, s: (n, 0, s)),
                pl.BlockSpec((Cout, Cin), lambda n, s: (0, 0)),
                pl.BlockSpec((Cout, 1), lambda n, s: (0, 0)),
            ],
            out_specs=pl.BlockSpec((pl.Squeezed(), Cout, ts), lambda n, s: (n, 0, s)),
        ),
        compiler_params=pltpu.CompilerParams(
            dimension_semantics=("parallel", "parallel"),
        ),
    )(x, w_fold.astype(jnp.float32), shift.reshape(Cout, 1).astype(jnp.float32))


# ----------------------------------------------------------------------------
# Module parameters (mirrors nn.Conv2d default init + fresh nn.BatchNorm2d)
# ----------------------------------------------------------------------------
def init_params(key, in_channels, out_channels):
    k_w, k_b = jax.random.split(key)
    # PyTorch Conv2d: kaiming_uniform(a=sqrt(5)) -> bound = 1/sqrt(fan_in); 1x1 => fan_in = Cin
    bound = 1.0 / (in_channels ** 0.5)
    return {
        # conv weight stored PyTorch-style (Cout, Cin) (1x1 kernel squeezed)
        "weight": jax.random.uniform(k_w, (out_channels, in_channels),
                                     minval=-bound, maxval=bound, dtype=jnp.float32),
        "bias": jax.random.uniform(k_b, (out_channels,),
                                   minval=-bound, maxval=bound, dtype=jnp.float32),
        # BatchNorm2d __init__ state (inference mode)
        "bn_gamma": jnp.ones((out_channels,), jnp.float32),
        "bn_beta": jnp.zeros((out_channels,), jnp.float32),
        "bn_mean": jnp.zeros((out_channels,), jnp.float32),
        "bn_var": jnp.ones((out_channels,), jnp.float32),
        "bn_eps": 1e-5,
    }


# ----------------------------------------------------------------------------
# Forward (NCHW in -> NCHW out, matching the PyTorch module; no transposes)
# ----------------------------------------------------------------------------
def deep_supervision_forward(x_nchw, params, *, ts=32768, out_dtype=None):
    N, Cin, H, W = x_nchw.shape
    w = params["weight"]                                   # (Cout, Cin)
    Cout = w.shape[0]

    # Fold BN (inference) into the conv: scale into the weight, shift into one add.
    inv_std = jax.lax.rsqrt(params["bn_var"] + params["bn_eps"])
    scale = params["bn_gamma"] * inv_std                   # (Cout,)
    w_fold = w * scale[:, None]                            # (Cout, Cin), f32
    shift = (params["bias"] - params["bn_mean"]) * scale + params["bn_beta"]

    x_flat = x_nchw.reshape(N, Cin, H * W)                 # free reshape (contiguous)
    out = conv1x1_bn_relu_nchw(x_flat, w_fold, shift, ts=ts, out_dtype=out_dtype)
    return out.reshape(N, Cout, H, W)


# ----------------------------------------------------------------------------
# Pure-JAX reference for a numerical sanity check
# ----------------------------------------------------------------------------
def reference_forward(x_nchw, params):
    y = jnp.einsum("oi,nihw->nohw", params["weight"], x_nchw,
                   precision=jax.lax.Precision.HIGHEST)
    y = y + params["bias"][None, :, None, None]
    inv_std = jax.lax.rsqrt(params["bn_var"] + params["bn_eps"])
    y = (y - params["bn_mean"][None, :, None, None]) * \
        (params["bn_gamma"] * inv_std)[None, :, None, None] + \
        params["bn_beta"][None, :, None, None]
    return jnp.maximum(y, 0.0)


if __name__ == "__main__":
    key = jax.random.PRNGKey(0)
    k_x, k_p = jax.random.split(key)

    # small shapes consistent with the module
    N, in_channels, out_channels, H, W = 2, 4, 4, 16, 16

    x = jax.random.normal(k_x, (N, in_channels, H, W), dtype=jnp.float32)  # NCHW
    params = init_params(k_p, in_channels, out_channels)

    out = jax.block_until_ready(deep_supervision_forward(x, params))
    ref = jax.block_until_ready(reference_forward(x, params))

    assert out.shape == (N, out_channels, H, W), out.shape
    err = float(jnp.max(jnp.abs(out - ref)))
    assert jnp.allclose(out, ref, rtol=1e-4, atol=1e-4), err
    print("KERNEL_OK")
</pallas_src>

<mosaic_0001>
module attributes {stable_mosaic.version = 11 : i64} {
  func.func @_conv1x1_bn_relu_kernel(%arg0: i32, %arg1: i32, %arg2: memref<1x4x256xf32, #tpu.memory_space<vmem>>, %arg3: memref<4x4xf32, #tpu.memory_space<vmem>>, %arg4: memref<4x1xf32, #tpu.memory_space<vmem>>, %arg5: memref<1x4x256xf32, #tpu.memory_space<vmem>>) attributes {dimension_semantics = [#tpu.dimension_semantics<parallel>, #tpu.dimension_semantics<parallel>], iteration_bounds = array<i64: 2, 1>, scalar_prefetch = 0 : i64, scratch_operands = 0 : i64, tpu.core_type = #tpu.core_type<tc>, window_params = [{transform_indices = @transform_0, window_bounds = array<i64: 1, 4, 256>}, {pipeline_mode = #tpu.pipeline_mode<synchronous>, transform_indices = @transform_1, window_bounds = array<i64: 4, 4>}, {pipeline_mode = #tpu.pipeline_mode<synchronous>, transform_indices = @transform_2, window_bounds = array<i64: 4, 1>}, {transform_indices = @transform_3, window_bounds = array<i64: 1, 4, 256>}]} {
    %c0 = arith.constant 0 : index
    %c0_0 = arith.constant 0 : index
    %0 = vector.load %arg3[%c0, %c0_0] : memref<4x4xf32, #tpu.memory_space<vmem>>, vector<4x4xf32>
    %c0_1 = arith.constant 0 : index
    %c0_2 = arith.constant 0 : index
    %c0_3 = arith.constant 0 : index
    %1 = vector.load %arg2[%c0_1, %c0_2, %c0_3] : memref<1x4x256xf32, #tpu.memory_space<vmem>>, vector<1x4x256xf32>
    %2 = vector.shape_cast %1 : vector<1x4x256xf32> to vector<4x256xf32>
    %cst = arith.constant dense<0.000000e+00> : vector<4x256xf32>
    %3 = tpu.matmul %0, %2, %cst {dimension_numbers = #tpu.dot_dimension_numbers<[1], [0], [0], [1], [0, 0, 1, 1], [], []>} : vector<4x4xf32>, vector<4x256xf32>, vector<4x256xf32> -> vector<4x256xf32>
    %c0_4 = arith.constant 0 : index
    %c0_5 = arith.constant 0 : index
    %4 = vector.load %arg4[%c0_4, %c0_5] : memref<4x1xf32, #tpu.memory_space<vmem>>, vector<4x1xf32>
    %5 = vector.broadcast %4 : vector<4x1xf32> to vector<4x256xf32>
    %6 = arith.addf %3, %5 : vector<4x256xf32>
    %cst_6 = arith.constant 0.000000e+00 : f32
    %7 = vector.broadcast %cst_6 : f32 to vector<4x256xf32>
    %8 = arith.maximumf %6, %7 : vector<4x256xf32>
    %c0_7 = arith.constant 0 : index
    %c0_8 = arith.constant 0 : index
    %c0_9 = arith.constant 0 : index
    %9 = vector.load %arg5[%c0_7, %c0_8, %c0_9] : memref<1x4x256xf32, #tpu.memory_space<vmem>>, vector<1x4x256xf32>
    %10 = vector.shape_cast %9 : vector<1x4x256xf32> to vector<4x256xf32>
    %11 = vector.shape_cast %8 : vector<4x256xf32> to vector<1x4x256xf32>
    tpu.vector_store %arg5[%c0_7, %c0_8, %c0_9], %11 {strides = array<i32>} : memref<1x4x256xf32, #tpu.memory_space<vmem>>, vector<1x4x256xf32>,
    return
  }
  func.func @transform_0(%arg0: i32, %arg1: i32) -> (i32, i32, i32) {
    %c0_i32 = arith.constant 0 : i32
    %c0_i32_0 = arith.constant 0 : i32
    return %arg0, %c0_i32, %arg1 : i32, i32, i32
  }
  func.func @transform_1(%arg0: i32, %arg1: i32) -> (i32, i32) {
    %c0_i32 = arith.constant 0 : i32
    %c0_i32_0 = arith.constant 0 : i32
    %c0_i32_1 = arith.constant 0 : i32
    return %c0_i32, %c0_i32_0 : i32, i32
  }
  func.func @transform_2(%arg0: i32, %arg1: i32) -> (i32, i32) {
    %c0_i32 = arith.constant 0 : i32
    %c0_i32_0 = arith.constant 0 : i32
    %c0_i32_1 = arith.constant 0 : i32
    return %c0_i32, %c0_i32_0 : i32, i32
  }
  func.func @transform_3(%arg0: i32, %arg1: i32) -> (i32, i32, i32) {
    %c0_i32 = arith.constant 0 : i32
    %c0_i32_0 = arith.constant 0 : i32
    return %arg0, %c0_i32, %arg1 : i32, i32, i32
  }
}

</mosaic_0001>

<llo_original>
// kernel: tpu_custom_call.1
$region0: #{tpu_custom_call.1}
  #allocation0 [shape = 'u32[]', space=smem, size = 0x4, offset = 0x4, fixed_abs, tag = 'smem constant byte address 0x4 - core index']
  #allocation1 [shape = 'u32[144,128]{1,0:T(1,128)}', space=vmem, size = 0x12000, scoped, tag = 'internal scratch']
  %s0 = inlined_call_operand.hbm [shape: f32[2,4,256], index: 0, kind: input, shape index: {}]
  %s1 = inlined_call_operand.vmem [shape: f32[4,4], index: 1, kind: input, shape index: {}]
  %s2 = inlined_call_operand.vmem [shape: f32[4,1], index: 2, kind: input, shape index: {}]
  %s3 = inlined_call_operand.hbm [shape: f32[2,4,256], index: 3, kind: output, shape index: {}]
  %s4 = sld [smem:[#allocation0]]
  $region49: #{tpu_custom_call.1} parent=0
    _
  %s6 = ssub.s32 1, %s4
  %s7 = scalar_select 0, %s6, %s4
  $region1: #{tpu_custom_call.1} parent=0
    #allocation2 [shape = 'u8[8192]{0}', space=vmem, size = 0x2000, scoped, tag = 'input window, operand 0']
    #allocation3 [shape = 's32[2]{0}', space=sflag, size = 0x8, scoped, tag = 'scoped memory for tpu_custom_call.1']
    #allocation4 [shape = 's32[2]{0}', space=sflag, size = 0x8, scoped, tag = 'scoped memory for tpu_custom_call.1']
    #allocation5 [shape = 'u8[8192]{0}', space=vmem, size = 0x2000, scoped, tag = 'output window, operand 0']
    %8 = vsyncpa [#allocation3], 0
    %s9 = scalar_lea.sflag [#allocation3], 1
    %10 = vsyncpa %s9, 0
    %11 = vsyncpa [#allocation4], 0
    %s12 = scalar_lea.sflag [#allocation4], 1
    %13 = vsyncpa %s12, 0
    loop: start=0, step=1, limit=4
    $region2: #{tpu_custom_call.1} parent=1 // loop_pre_header
      _
    $region3: #{tpu_custom_call.1} parent=1 // loop_header
      %s15 = sphi 0, %s19
      %p16 = scmp.ge.s32.totalorder %s15, 4
      %s22 = sphi 0, %s34
      %s23 = sphi 0, %s30
      %s24 = sphi 0, %s22
      %s25 = sphi 0, %s23
      %s26 = sphi 0, %s24
      %s27 = sphi 0, %s25
      %s39 = sphi 0, %s41
      %s42 = sphi 0, %s39
      %s43 = sphi 0, %s42
      %s59 = sphi 0, %s43
      %s63 = sphi 0, %s63
      %s65 = sphi 0, %s63
      %s66 = sphi 0, %s65
      %s80 = sphi 0, %s66
      %s84 = sphi 0, %s84
      %s86 = sphi 0, %s84
      %s87 = sphi 0, %s86
      %s101 = sphi 0, %s87
      %s109 = sphi 0, %s111
      %s112 = sphi 0, %s109
      %s113 = sphi 0, %s112
      %s129 = sphi 0, %s113
    $region4: #{tpu_custom_call.1} parent=1 // loop_header_branch
      %18 = sbr.rel (%p16) target = $region8
    $region5: #{tpu_custom_call.1} parent=1 // loop_body
      %s20 = ssub.s32 %s15, 1
      %s21 = ssub.s32 %s15, 2
      %s28 = sadd.s32 1, %s23
      %p29 = scmp.ge.s32.totalorder %s28, 1
      %s30 = scalar_select %p29, 0, %s28
      %s31 = sadd.s32 1, %s22
      %s32 = scalar_select %p29, %s31, %s22
      %p33 = scmp.ge.s32.totalorder %s32, 2
      %s34 = scalar_select %p33, 0, %s32
      %s35 = ssub.s32 %s22, %s34
      %s36 = ssub.s32 %s23, %s30
      %s37 = sor.u32 %s35, %s36
      %p38 = scmp.eq.s32.totalorder %s37, 0
      %s40 = sadd.s32 %s39, 1
      %s41 = scalar_select %p38, %s39, %s40
      %p44 = pneg %p38
      %p45 = scmp.eq.s32.totalorder %s15, 1
      %p46 = por %p44, %p45
      %p47 = scmp.ne.s32.totalorder %s39, %s42
      %p48 = scmp.eq.s32.totalorder %s15, 0
      %p49 = por %p47, %p48
      %p50 = scmp.ne.s32.totalorder %s39, %s42
      %p51 = scmp.eq.s32.totalorder %s20, 1
      %p52 = por %p50, %p51
      %p53 = scmp.ne.s32.totalorder %s42, %s43
      %p54 = scmp.eq.s32.totalorder %s20, 0
      %p55 = por %p53, %p54
      %p56 = scmp.ne.s32.totalorder %s42, %s43
      %p57 = scmp.eq.s32.totalorder %s21, 1
      %p58 = por %p56, %p57
      %p60 = scmp.ne.s32.totalorder %s43, %s59
      %p61 = scmp.eq.s32.totalorder %s21, 0
      %p62 = por %p60, %p61
      %s64 = sadd.s32 %s63, 1
      %p67 = scmp.eq.s32.totalorder %s15, 1
      %p68 = scmp.ne.s32.totalorder %s63, %s65
      %p69 = scmp.eq.s32.totalorder %s15, 0
      %p70 = por %p68, %p69
      %p71 = scmp.ne.s32.totalorder %s63, %s65
      %p72 = scmp.eq.s32.totalorder %s20, 1
      %p73 = por %p71, %p72
      %p74 = scmp.ne.s32.totalorder %s65, %s66
      %p75 = scmp.eq.s32.totalorder %s20, 0
      %p76 = por %p74, %p75
      %p77 = scmp.ne.s32.totalorder %s65, %s66
      %p78 = scmp.eq.s32.totalorder %s21, 1
      %p79 = por %p77, %p78
      %p81 = scmp.ne.s32.totalorder %s66, %s80
      %p82 = scmp.eq.s32.totalorder %s21, 0
      %p83 = por %p81, %p82
      %s85 = sadd.s32 %s84, 1
      %p88 = scmp.eq.s32.totalorder %s15, 1
      %p89 = scmp.ne.s32.totalorder %s84, %s86
      %p90 = scmp.eq.s32.totalorder %s15, 0
      %p91 = por %p89, %p90
      %p92 = scmp.ne.s32.totalorder %s84, %s86
      %p93 = scmp.eq.s32.totalorder %s20, 1
      %p94 = por %p92, %p93
      %p95 = scmp.ne.s32.totalorder %s86, %s87
      %p96 = scmp.eq.s32.totalorder %s20, 0
      %p97 = por %p95, %p96
      %p98 = scmp.ne.s32.totalorder %s86, %s87
      %p99 = scmp.eq.s32.totalorder %s21, 1
      %p100 = por %p98, %p99
      %p102 = scmp.ne.s32.totalorder %s87, %s101
      %p103 = scmp.eq.s32.totalorder %s21, 0
      %p104 = por %p102, %p103
      %s105 = ssub.s32 %s22, %s34
      %s106 = ssub.s32 %s23, %s30
      %s107 = sor.u32 %s105, %s106
      %p108 = scmp.eq.s32.totalorder %s107, 0
      %s110 = sadd.s32 %s109, 1
      %s111 = scalar_select %p108, %s109, %s110
      %p114 = pneg %p108
      %p115 = scmp.eq.s32.totalorder %s15, 1
      %p116 = por %p114, %p115
      %p117 = scmp.ne.s32.totalorder %s109, %s112
      %p118 = scmp.eq.s32.totalorder %s15, 0
      %p119 = por %p117, %p118
      %p120 = scmp.ne.s32.totalorder %s109, %s112
      %p121 = scmp.eq.s32.totalorder %s20, 1
      %p122 = por %p120, %p121
      %p123 = scmp.ne.s32.totalorder %s112, %s113
      %p124 = scmp.eq.s32.totalorder %s20, 0
      %p125 = por %p123, %p124
      %p126 = scmp.ne.s32.totalorder %s112, %s113
      %p127 = scmp.eq.s32.totalorder %s21, 1
      %p128 = por %p126, %p127
      %p130 = scmp.ne.s32.totalorder %s113, %s129
      %p131 = scmp.eq.s32.totalorder %s21, 0
      %p132 = por %p130, %p131
      %p133 = scmp.le.s32.totalorder 1, %s15
      %p134 = scmp.lt.s32.totalorder %s15, 3
      %p135 = pnand %p133, %p134
      %p136 = pneg %p135
      // Predicated region
      $region9: #{tpu_custom_call.1} parent=5 // pred_check
        _
      $region10: #{tpu_custom_call.1} parent=5 // pred_check_branch
        %138 = sbr.rel (%p135) target = $region12
      $region11: #{tpu_custom_call.1} parent=5 // pred_region
        %s139 = ssub.s32 %s15, 1
        // Predicated region
        $region13: #{tpu_custom_call.1} parent=11 // pred_check
          %p140 = pneg %p76
        $region14: #{tpu_custom_call.1} parent=11 // pred_check_branch
          %142 = sbr.rel (%p140) target = $region16
        $region15: #{tpu_custom_call.1} parent=11 // pred_region
          _
        $region16: #{tpu_custom_call.1} parent=11 // pred_fallthru
          _
        // Predicated region
        $region17: #{tpu_custom_call.1} parent=11 // pred_check
          %p143 = pneg %p97
        $region18: #{tpu_custom_call.1} parent=11 // pred_check_branch
          %145 = sbr.rel (%p143) target = $region20
        $region19: #{tpu_custom_call.1} parent=11 // pred_region
          _
        $region20: #{tpu_custom_call.1} parent=11 // pred_fallthru
          _
      $region12: #{tpu_custom_call.1} parent=5 // pred_fallthru
        _
      %p146 = scmp.lt.s32.totalorder %s15, 2
      // Predicated region
      $region21: #{tpu_custom_call.1} parent=5 // pred_check
        %p147 = pneg %p146
      $region22: #{tpu_custom_call.1} parent=5 // pred_check_branch
        %149 = sbr.rel (%p147) target = $region24
      $region23: #{tpu_custom_call.1} parent=5 // pred_region
        // Predicated region
        $region25: #{tpu_custom_call.1} parent=23 // pred_check
          %p150 = pneg %p49
        $region26: #{tpu_custom_call.1} parent=23 // pred_check_branch
          %152 = sbr.rel (%p150) target = $region28
        $region27: #{tpu_custom_call.1} parent=23 // pred_region
          %s153 = sand.u32 %s39, 1
          %s154 = scalar_lea.sflag [#allocation3], %s153
          %s155 = sand.u32 %s39, 1
          %s156 = smul.addr %s155, 8
          %s157 = scalar_lea.vmem [#allocation2], %s156
          %s158 = smul.u32 2, %s23
          %s160 = ssub.s32 128, 128
          %161 = vsyncadd %s154, %s160
          %s162 = smul.addr %s22, 2
          %s163 = sadd.s32 %s158, %s162
          %s164 = smul.addr %s163, 64
          %s165 = scalar_lea.hbm %s0, %s164
          %s167 = sshll.u32 %s157, 4
          %s168 = int_to_ptr.vmem [resolvable:$true] %s167
          %170 = dma.hbm_to_vmem [thread:$0]  %s165, 128, %s168, %s154
        $region28: #{tpu_custom_call.1} parent=23 // pred_fallthru
          _
      $region24: #{tpu_custom_call.1} parent=5 // pred_fallthru
        _
      %p171 = scmp.le.s32.totalorder 1, %s15
      %p172 = scmp.lt.s32.totalorder %s15, 3
      %p173 = pnand %p171, %p172
      %p174 = pneg %p173
      // Predicated region
      $region29: #{tpu_custom_call.1} parent=5 // pred_check
        _
      $region30: #{tpu_custom_call.1} parent=5 // pred_check_branch
        %176 = sbr.rel (%p173) target = $region32
      $region31: #{tpu_custom_call.1} parent=5 // pred_region
        %s177 = ssub.s32 %s15, 1
        %s178 = sand.u32 %s42, 1
        %s179 = scalar_lea.sflag [#allocation3], %s178
        %s180 = sand.u32 %s42, 1
        %s181 = smul.addr %s180, 8
        %s182 = scalar_lea.vmem [#allocation2], %s181
        // Predicated region
        $region33: #{tpu_custom_call.1} parent=31 // pred_check
          %p183 = pneg %p55
        $region34: #{tpu_custom_call.1} parent=31 // pred_check_branch
          %185 = sbr.rel (%p183) target = $region36
        $region35: #{tpu_custom_call.1} parent=31 // pred_region
          %186 = dma.done %s179, 128
        $region36: #{tpu_custom_call.1} parent=31 // pred_fallthru
          _
        %s187 = sand.u32 %s42, 1
        %s188 = scalar_lea.sflag [#allocation3], %s187
        %s189 = sand.u32 %s42, 1
        %s190 = smul.addr %s189, 8
        %s191 = scalar_lea.vmem [#allocation2], %s190
        %p192 = pneg %p55
        %p193 = pneg %p52
        %p194 = pneg %p76
        %p195 = pneg %p73
        %p196 = pneg %p97
        %p197 = pneg %p94
        %p198 = pneg %p125
        %p199 = pneg %p122
        %s200 = sand.u32 %s112, 1
        %s201 = scalar_lea.sflag [#allocation4], %s200
        %s202 = sand.u32 %s112, 1
        %s203 = smul.addr %s202, 8
        %s204 = scalar_lea.vmem [#allocation5], %s203
        %s205 = smul.u32 2, %s25
        %s206 = smul.u32 2, %s25
        %v207 = vld [vmem:[%s1] sm:$0xf]
        %v208 = vld [vmem:[%s182] sm:$0xff]
        %v209 = vld [vmem:[%s2] sm:$0xf]
        %211 = vset.pattern.permute.xlu0 0
        %212 = vperm.xlu0 %211, %v209
        %v213 = vpop.permute.xlu0 %212
        %v216 = vcombine.high %v208, %v208
        %vm217 = vcmask 31744
        %v219 = vsel %vm217, %v207, 0
        %vm221 = vcmask 1043456
        %v222 = vsel %vm221, %v208, 0
        %v224 = vsel %vm221, %v216, 0
        %226 = vmatprep.subr.mxu0 %v224
        %227 = vmatpush1.msra.mxu0 %v222
        %228 = vmatprep.subr.mxu0 0.0
        %229 = vmatpush1.msra.mxu0 0.0
        %230 = vmatprep.subr.mxu0 0.0
        %231 = vmatpush1.msra.mxu0 0.0
        %232 = vmatprep.subr.mxu0 0.0
        %233 = vmatpush1.msra.mxu0 0.0
        %234 = vmatprep.subr.mxu0 0.0
        %235 = vmatpush1.msra.mxu0 0.0
        %236 = vmatprep.subr.mxu0 0.0
        %237 = vmatpush1.msra.mxu0 0.0
        %238 = vmatprep.subr.mxu0 0.0
        %239 = vmatpush1.msra.mxu0 0.0
        %240 = vmatprep.subr.mxu0 0.0
        %241 = vmatpush1.msra.mxu0 0.0
        %242 = vmatprep.subr.mxu0 0.0
        %243 = vmatpush1.msra.mxu0 0.0
        %244 = vmatprep.subr.mxu0 0.0
        %245 = vmatpush1.msra.mxu0 0.0
        %246 = vmatprep.subr.mxu0 0.0
        %247 = vmatpush1.msra.mxu0 0.0
        %248 = vmatprep.subr.mxu0 0.0
        %249 = vmatpush1.msra.mxu0 0.0
        %250 = vmatprep.subr.mxu0 0.0
        %251 = vmatpush1.msra.mxu0 0.0
        %252 = vmatprep.subr.mxu0 0.0
        %253 = vmatpush1.msra.mxu0 0.0
        %254 = vmatprep.subr.mxu0 0.0
        %255 = vmatpush1.msra.mxu0 0.0
        %256 = vmatprep.subr.mxu0 0.0
        %257 = vmatpush1.msra.mxu0 0.0
        %258 = vmatprep.subr.mxu0 0.0
        %259 = vmatpush1.msra.mxu0 0.0
        %260 = vmatprep.subr.mxu0 0.0
        %261 = vmatpush1.msra.mxu0 0.0
        %262 = vmatprep.subr.mxu0 0.0
        %263 = vmatpush1.msra.mxu0 0.0
        %264 = vmatprep.subr.mxu0 0.0
        %265 = vmatpush1.msra.mxu0 0.0
        %266 = vmatprep.subr.mxu0 0.0
        %267 = vmatpush1.msra.mxu0 0.0
        %268 = vmatprep.subr.mxu0 0.0
        %269 = vmatpush1.msra.mxu0 0.0
        %270 = vmatprep.subr.mxu0 0.0
        %271 = vmatpush1.msra.mxu0 0.0
        %272 = vmatprep.subr.mxu0 0.0
        %273 = vmatpush1.msra.mxu0 0.0
        %274 = vmatprep.subr.mxu0 0.0
        %275 = vmatpush1.msra.mxu0 0.0
        %276 = vmatprep.subr.mxu0 0.0
        %277 = vmatpush1.msra.mxu0 0.0
        %278 = vmatprep.subr.mxu0 0.0
        %279 = vmatpush1.msra.mxu0 0.0
        %280 = vmatprep.subr.mxu0 0.0
        %281 = vmatpush1.msra.mxu0 0.0
        %282 = vmatprep.subr.mxu0 0.0
        %283 = vmatpush1.msra.mxu0 0.0
        %284 = vmatprep.subr.mxu0 0.0
        %285 = vmatpush1.msra.mxu0 0.0
        %286 = vmatprep.subr.mxu0 0.0
        %287 = vmatpush1.msra.mxu0 0.0
        %288 = vmatprep.subr.mxu0 0.0
        %289 = vmatpush1.msra.mxu0 0.0
        %290 = vmatprep.mubr.f32.mxu0 0.0
        %291 = vmatmul.mubr.f32.gmra.mrb[0].mxu0 %v219
        %v292 = vpop.f32.mrb[0].mxu0
        %v293 = vadd.f32 %v213, %v292
        %v294 = vpop.f32.mrb[0].mxu0
        %v295 = vadd.f32 %v213, %v294
        %296 = vdwg.mxu0
        %v297 = vmax.f32 %v293, 0.0
        %v298 = vmax.f32 %v295, 0.0
        %v301 = vcombine.low %v297, %v298
        %303 = vst [vmem:[%s204] sm:$0xff] %v301
        %s304 = sand.u32 %s112, 1
        %s305 = scalar_lea.sflag [#allocation4], %s304
        %s306 = sand.u32 %s112, 1
        %s307 = smul.addr %s306, 8
        %s308 = scalar_lea.vmem [#allocation5], %s307
        // Predicated region
        $region37: #{tpu_custom_call.1} parent=31 // pred_check
          %p309 = pneg %p122
        $region38: #{tpu_custom_call.1} parent=31 // pred_check_branch
          %311 = sbr.rel (%p309) target = $region40
        $region39: #{tpu_custom_call.1} parent=31 // pred_region
          %s312 = smul.u32 2, %s25
          %s314 = ssub.s32 128, 128
          %315 = vsyncadd %s305, %s314
          %s316 = smul.addr %s24, 2
          %s317 = sadd.s32 %s312, %s316
          %s318 = smul.addr %s317, 64
          %s319 = scalar_lea.hbm %s3, %s318
          %s321 = sshll.u32 %s308, 4
          %s322 = int_to_ptr.vmem [resolvable:$true] %s321
          %324 = dma.vmem_to_hbm [thread:$0]  %s322, 128, %s319, %s305
        $region40: #{tpu_custom_call.1} parent=31 // pred_fallthru
          _
      $region32: #{tpu_custom_call.1} parent=5 // pred_fallthru
        _
      %p325 = scmp.le.s32.totalorder 2, %s15
      // Predicated region
      $region41: #{tpu_custom_call.1} parent=5 // pred_check
        %p326 = pneg %p325
      $region42: #{tpu_custom_call.1} parent=5 // pred_check_branch
        %328 = sbr.rel (%p326) target = $region44
      $region43: #{tpu_custom_call.1} parent=5 // pred_region
        %s329 = ssub.s32 %s15, 2
        // Predicated region
        $region45: #{tpu_custom_call.1} parent=43 // pred_check
          %p330 = pneg %p128
        $region46: #{tpu_custom_call.1} parent=43 // pred_check_branch
          %332 = sbr.rel (%p330) target = $region48
        $region47: #{tpu_custom_call.1} parent=43 // pred_region
          %s333 = sand.u32 %s113, 1
          %s334 = scalar_lea.sflag [#allocation4], %s333
          %s335 = sand.u32 %s113, 1
          %s336 = smul.addr %s335, 8
          %s337 = scalar_lea.vmem [#allocation5], %s336
          %338 = dma.done %s334, 128
        $region48: #{tpu_custom_call.1} parent=43 // pred_fallthru
          _
      $region44: #{tpu_custom_call.1} parent=5 // pred_fallthru
        _
    $region6: #{tpu_custom_call.1} parent=1 // loop_footer
      %s19 = sadd.s32 1, %s15
    $region7: #{tpu_custom_call.1} parent=1 // loop_footer_branch
      %14 = sbr.rel target = $region3
    $region8: #{tpu_custom_call.1} parent=1 // loop_exit
      _
    %339 = vsyncpa [#allocation3], 1
    %s340 = scalar_lea.sflag [#allocation3], 1
    %341 = vsyncpa %s340, 1
    %342 = vsyncpa [#allocation4], 1
    %s343 = scalar_lea.sflag [#allocation4], 1
    %344 = vsyncpa %s343, 1

</llo_original>
